<compile_context>
chip_gen: v7x
topology: tpu7x:2x2x1
jax: 0.10.0
libtpu: 0.0.40
codegen_flags: <defaults>
</compile_context>

<pallas_src>
import functools
import math

import jax
import jax.numpy as jnp
from jax.experimental import pallas as pl
from jax.experimental.pallas import tpu as pltpu


def _round_up(a: int, b: int) -> int:
    return (a + b - 1) // b * b


def _linear_embedding_kernel(x_ref, w_ref, b_ref, o_ref, *, scale):
    # MXU matmul (f32 accumulation) + bias + sqrt(d_model) scale on the VPU.
    y = jnp.dot(x_ref[...], w_ref[...], preferred_element_type=jnp.float32)
    o_ref[...] = ((y + b_ref[...]) * scale).astype(o_ref.dtype)


def linear_embedding(x, weight, bias, d_model, *, tm_target=2048,
                     compute_dtype=None):
    """y = (x @ weight.T + bias) * sqrt(d_model).

    x: (..., inp_size); weight: (d_model, inp_size); bias: (d_model,).
    compute_dtype: optional narrower I/O dtype (e.g. jnp.bfloat16 on v6e/v7x)
                   to halve HBM traffic; accumulation stays f32.
    """
    *lead, inp_size = x.shape
    m = math.prod(lead) if lead else 1
    out_dtype = x.dtype

    if compute_dtype is not None:
        x = x.astype(compute_dtype)
        weight = weight.astype(compute_dtype)
        bias = bias.astype(compute_dtype)

    # Lane-dense packing factor: fold `pack` logical output rows into one
    # 128-lane row so output stores are unmasked.
    pack = 128 // d_model if (d_model < 128 and 128 % d_model == 0) else 1

    # Row tile: multiple of 8*pack so the packed block's sublane dim is a
    # multiple of 8; pad M so the grid divides evenly (padded rows sliced off).
    row_align = 8 * pack
    tm = min(_round_up(tm_target, row_align), _round_up(m, row_align))
    m_pad = _round_up(m, tm)

    x2d = x.reshape(m, inp_size)
    if m_pad != m:
        x2d = jnp.pad(x2d, ((0, m_pad - m), (0, 0)))

    kp = inp_size * pack
    np_ = d_model * pack
    wt = weight.T                                     # (K, N) -- tiny, done once
    if pack > 1:
        # Block-diagonal weight (pack*K, pack*N).  With x rows packed
        # `pack`-per-row (free row-major reshape), the matmul output is exactly
        # the row-major packing of the (m, d_model) result.
        w_in = jnp.kron(jnp.eye(pack, dtype=wt.dtype), wt)
        b_in = jnp.tile(bias, pack).reshape(1, np_)
    else:
        w_in = wt
        b_in = bias.reshape(1, d_model)
    xp = x2d.reshape(m_pad // pack, kp)

    tm_rows = tm // pack             # packed rows per grid step
    mp_rows = m_pad // pack
    grid = (m_pad // tm,)

    itemsize = jnp.dtype(x.dtype).itemsize
    cost = pl.CostEstimate(
        flops=2 * m_pad * inp_size * d_model,
        transcendentals=0,
        bytes_accessed=(m_pad * inp_size + m_pad * d_model) * itemsize
                       + (kp * np_ + np_) * itemsize,
    )

    out = pl.pallas_call(
        functools.partial(_linear_embedding_kernel,
                          scale=float(math.sqrt(d_model))),
        out_shape=jax.ShapeDtypeStruct((mp_rows, np_), x.dtype),
        grid=grid,
        in_specs=[
            pl.BlockSpec((tm_rows, kp), lambda i: (i, 0)),   # x: streamed tiles
            pl.BlockSpec((kp, np_), lambda i: (0, 0)),       # weight: resident
            pl.BlockSpec((1, np_), lambda i: (0, 0)),        # bias: resident
        ],
        out_specs=pl.BlockSpec((tm_rows, np_), lambda i: (i, 0)),
        compiler_params=pltpu.CompilerParams(
            dimension_semantics=("parallel",),
            vmem_limit_bytes=32 * 1024 * 1024,
        ),
        cost_estimate=cost,
    )(xp, w_in, b_in)

    y = out.reshape(m_pad, d_model)[:m]
    return y.astype(out_dtype).reshape(*lead, d_model)


if __name__ == "__main__":
    # Small shapes consistent with the module: batch=2, seq=8, inp_size=4, d_model=32
    batch, seq, inp_size, d_model = 2, 8, 4, 32

    key = jax.random.PRNGKey(0)
    kx, kw, kb = jax.random.split(key, 3)

    x = jax.random.normal(kx, (batch, seq, inp_size), dtype=jnp.float32)
    # Deterministic init mimicking nn.Linear's uniform(-1/sqrt(fan_in), 1/sqrt(fan_in))
    bound = 1.0 / math.sqrt(inp_size)
    weight = jax.random.uniform(kw, (d_model, inp_size), jnp.float32, -bound, bound)
    bias = jax.random.uniform(kb, (d_model,), jnp.float32, -bound, bound)

    y = linear_embedding(x, weight, bias, d_model)
    y = jax.block_until_ready(y)

    # Pure-JAX reference check
    y_ref = (x @ weight.T + bias) * math.sqrt(d_model)
    assert y.shape == (batch, seq, d_model)
    assert jnp.allclose(y, y_ref, atol=1e-5, rtol=1e-5)

    print("KERNEL_OK")
</pallas_src>

<mosaic_0001>
module attributes {stable_mosaic.version = 11 : i64} {
  func.func @_linear_embedding_kernel(%arg0: i32, %arg1: memref<8x16xf32, #tpu.memory_space<vmem>>, %arg2: memref<16x128xf32, #tpu.memory_space<vmem>>, %arg3: memref<1x128xf32, #tpu.memory_space<vmem>>, %arg4: memref<8x128xf32, #tpu.memory_space<vmem>>) attributes {dimension_semantics = [#tpu.dimension_semantics<parallel>], iteration_bounds = array<i64: 1>, scalar_prefetch = 0 : i64, scratch_operands = 0 : i64, tpu.core_type = #tpu.core_type<tc>, window_params = [{transform_indices = @transform_0, window_bounds = array<i64: 8, 16>}, {pipeline_mode = #tpu.pipeline_mode<synchronous>, transform_indices = @transform_1, window_bounds = array<i64: 16, 128>}, {pipeline_mode = #tpu.pipeline_mode<synchronous>, transform_indices = @transform_2, window_bounds = array<i64: 1, 128>}, {transform_indices = @transform_3, window_bounds = array<i64: 8, 128>}]} {
    %c0 = arith.constant 0 : index
    %c0_0 = arith.constant 0 : index
    %0 = vector.load %arg1[%c0, %c0_0] : memref<8x16xf32, #tpu.memory_space<vmem>>, vector<8x16xf32>
    %c0_1 = arith.constant 0 : index
    %c0_2 = arith.constant 0 : index
    %1 = vector.load %arg2[%c0_1, %c0_2] : memref<16x128xf32, #tpu.memory_space<vmem>>, vector<16x128xf32>
    %cst = arith.constant dense<0.000000e+00> : vector<8x128xf32>
    %2 = tpu.matmul %0, %1, %cst {dimension_numbers = #tpu.dot_dimension_numbers<[1], [0], [0], [1], [0, 0, 1, 1], [], []>} : vector<8x16xf32>, vector<16x128xf32>, vector<8x128xf32> -> vector<8x128xf32>
    %c0_3 = arith.constant 0 : index
    %c0_4 = arith.constant 0 : index
    %3 = vector.load %arg3[%c0_3, %c0_4] : memref<1x128xf32, #tpu.memory_space<vmem>>, vector<1x128xf32>
    %4 = vector.broadcast %3 : vector<1x128xf32> to vector<8x128xf32>
    %5 = arith.addf %2, %4 : vector<8x128xf32>
    %cst_5 = arith.constant 5.65685415 : f32
    %6 = vector.broadcast %cst_5 : f32 to vector<8x128xf32>
    %7 = arith.mulf %5, %6 : vector<8x128xf32>
    %c0_6 = arith.constant 0 : index
    %c0_7 = arith.constant 0 : index
    %8 = vector.load %arg4[%c0_6, %c0_7] : memref<8x128xf32, #tpu.memory_space<vmem>>, vector<8x128xf32>
    tpu.vector_store %arg4[%c0_6, %c0_7], %7 {strides = array<i32>} : memref<8x128xf32, #tpu.memory_space<vmem>>, vector<8x128xf32>,
    return
  }
  func.func @transform_0(%arg0: i32) -> (i32, i32) {
    %c0_i32 = arith.constant 0 : i32
    %c0_i32_0 = arith.constant 0 : i32
    return %arg0, %c0_i32 : i32, i32
  }
  func.func @transform_1(%arg0: i32) -> (i32, i32) {
    %c0_i32 = arith.constant 0 : i32
    %c0_i32_0 = arith.constant 0 : i32
    %c0_i32_1 = arith.constant 0 : i32
    return %c0_i32, %c0_i32_0 : i32, i32
  }
  func.func @transform_2(%arg0: i32) -> (i32, i32) {
    %c0_i32 = arith.constant 0 : i32
    %c0_i32_0 = arith.constant 0 : i32
    %c0_i32_1 = arith.constant 0 : i32
    return %c0_i32, %c0_i32_0 : i32, i32
  }
  func.func @transform_3(%arg0: i32) -> (i32, i32) {
    %c0_i32 = arith.constant 0 : i32
    %c0_i32_0 = arith.constant 0 : i32
    return %arg0, %c0_i32 : i32, i32
  }
}

</mosaic_0001>

<llo_original>
// kernel: tpu_custom_call.1
$region0: #{tpu_custom_call.1}
  #allocation0 [shape = 'u32[]', space=smem, size = 0x4, offset = 0x4, fixed_abs, tag = 'smem constant byte address 0x4 - core index']
  #allocation1 [shape = 'u32[144,128]{1,0:T(1,128)}', space=vmem, size = 0x12000, scoped, tag = 'internal scratch']
  %s0 = inlined_call_operand.hbm [shape: f32[8,16], index: 0, kind: input, shape index: {}]
  %s1 = inlined_call_operand.hbm [shape: f32[16,128], index: 1, kind: input, shape index: {}]
  %s2 = inlined_call_operand.vmem [shape: f32[1,128], index: 2, kind: input, shape index: {}]
  %s3 = inlined_call_operand.hbm [shape: f32[8,128], index: 3, kind: output, shape index: {}]
  %s4 = sld [smem:[#allocation0]]
  $region30: #{tpu_custom_call.1} parent=0
    _
  %s6 = ssub.s32 1, %s4
  %s7 = scalar_select 0, %s6, %s4
  $region1: #{tpu_custom_call.1} parent=0
    #allocation2 [shape = 'u8[4096]{0}', space=vmem, size = 0x1000, scoped, tag = 'input window, operand 0, single buffered']
    #allocation3 [shape = 's32[1]{0}', space=sflag, size = 0x4, scoped, tag = 'scoped memory for tpu_custom_call.1']
    #allocation4 [shape = 's32[1]{0}', space=sflag, size = 0x4, scoped, tag = 'scoped memory for tpu_custom_call.1']
    #allocation5 [shape = 'u8[8192]{0}', space=vmem, size = 0x2000, scoped, tag = 'input window, operand 1, single buffered']
    #allocation6 [shape = 's32[1]{0}', space=sflag, size = 0x4, scoped, tag = 'scoped memory for tpu_custom_call.1']
    #allocation7 [shape = 'u8[4096]{0}', space=vmem, size = 0x1000, scoped, tag = 'output window, operand 0, single buffered']
    %8 = vsyncpa [#allocation3], 0
    %9 = vsyncpa [#allocation6], 0
    %10 = vsyncpa [#allocation4], 0
    // Predicated region
    $region2: #{tpu_custom_call.1} parent=1 // pred_check
      _
    $region3: #{tpu_custom_call.1} parent=1 // pred_check_branch
      %12 = sbr.rel (0) target = $region5
    $region4: #{tpu_custom_call.1} parent=1 // pred_region
      %s14 = ssub.s32 128, 128
      %15 = vsyncadd [#allocation3], %s14
      %s17 = sshll.u32 [#allocation2], 4
      %s18 = int_to_ptr.vmem [resolvable:$true] %s17
      %20 = dma.hbm_to_vmem [thread:$0]  %s0, 128, %s18, [#allocation3]
    $region5: #{tpu_custom_call.1} parent=1 // pred_fallthru
      _
    // Predicated region
    $region6: #{tpu_custom_call.1} parent=1 // pred_check
      _
    $region7: #{tpu_custom_call.1} parent=1 // pred_check_branch
      %22 = sbr.rel (0) target = $region9
    $region8: #{tpu_custom_call.1} parent=1 // pred_region
      %s24 = ssub.s32 256, 256
      %25 = vsyncadd [#allocation6], %s24
      %s26 = sshll.u32 [#allocation5], 4
      %s27 = int_to_ptr.vmem [resolvable:$true] %s26
      %32 = dma.hbm_to_vmem [thread:$0]  %s1, 256, %s27, [#allocation6], 128, 128, 8
    $region9: #{tpu_custom_call.1} parent=1 // pred_fallthru
      _
    // Predicated region
    $region10: #{tpu_custom_call.1} parent=1 // pred_check
      _
    $region11: #{tpu_custom_call.1} parent=1 // pred_check_branch
      %34 = sbr.rel (0) target = $region13
    $region12: #{tpu_custom_call.1} parent=1 // pred_region
      _
    $region13: #{tpu_custom_call.1} parent=1 // pred_fallthru
      _
    // Predicated region
    $region14: #{tpu_custom_call.1} parent=1 // pred_check
      _
    $region15: #{tpu_custom_call.1} parent=1 // pred_check_branch
      %36 = sbr.rel (0) target = $region17
    $region16: #{tpu_custom_call.1} parent=1 // pred_region
      %37 = dma.done [#allocation3], 128
    $region17: #{tpu_custom_call.1} parent=1 // pred_fallthru
      _
    // Predicated region
    $region18: #{tpu_custom_call.1} parent=1 // pred_check
      _
    $region19: #{tpu_custom_call.1} parent=1 // pred_check_branch
      %39 = sbr.rel (0) target = $region21
    $region20: #{tpu_custom_call.1} parent=1 // pred_region
      %40 = dma.done [#allocation6], 256
    $region21: #{tpu_custom_call.1} parent=1 // pred_fallthru
      _
    %v41 = vld [vmem:[#allocation2] sm:$0xff]
    %v42 = vld [vmem:[#allocation5] sm:$0xff]
    %v43 = vld [vmem:[#allocation5 + $0x8] sm:$0xff]
    %v44 = vld [vmem:[%s2] sm:$0x1]
    %v46 = vlaneseq
    %v47 = vshrl.u32 %v46, 7
    %v48 = vsub.s32 0, %v47
    %v49 = vrot.slane %v44, %v48
    %vm51 = vcmask 130048
    %v53 = vsel %vm51, %v41, 0
    %55 = vmatprep.subr.mxu0 0.0
    %56 = vmatpush1.msra.mxu0 %v42
    %57 = vmatprep.subr.mxu0 0.0
    %58 = vmatpush1.msra.mxu0 %v43
    %59 = vmatprep.subr.mxu0 0.0
    %60 = vmatpush1.msra.mxu0 0.0
    %61 = vmatprep.subr.mxu0 0.0
    %62 = vmatpush1.msra.mxu0 0.0
    %63 = vmatprep.subr.mxu0 0.0
    %64 = vmatpush1.msra.mxu0 0.0
    %65 = vmatprep.subr.mxu0 0.0
    %66 = vmatpush1.msra.mxu0 0.0
    %67 = vmatprep.subr.mxu0 0.0
    %68 = vmatpush1.msra.mxu0 0.0
    %69 = vmatprep.subr.mxu0 0.0
    %70 = vmatpush1.msra.mxu0 0.0
    %71 = vmatprep.subr.mxu0 0.0
    %72 = vmatpush1.msra.mxu0 0.0
    %73 = vmatprep.subr.mxu0 0.0
    %74 = vmatpush1.msra.mxu0 0.0
    %75 = vmatprep.subr.mxu0 0.0
    %76 = vmatpush1.msra.mxu0 0.0
    %77 = vmatprep.subr.mxu0 0.0
    %78 = vmatpush1.msra.mxu0 0.0
    %79 = vmatprep.subr.mxu0 0.0
    %80 = vmatpush1.msra.mxu0 0.0
    %81 = vmatprep.subr.mxu0 0.0
    %82 = vmatpush1.msra.mxu0 0.0
    %83 = vmatprep.subr.mxu0 0.0
    %84 = vmatpush1.msra.mxu0 0.0
    %85 = vmatprep.subr.mxu0 0.0
    %86 = vmatpush1.msra.mxu0 0.0
    %87 = vmatprep.subr.mxu0 0.0
    %88 = vmatpush1.msra.mxu0 0.0
    %89 = vmatprep.subr.mxu0 0.0
    %90 = vmatpush1.msra.mxu0 0.0
    %91 = vmatprep.subr.mxu0 0.0
    %92 = vmatpush1.msra.mxu0 0.0
    %93 = vmatprep.subr.mxu0 0.0
    %94 = vmatpush1.msra.mxu0 0.0
    %95 = vmatprep.subr.mxu0 0.0
    %96 = vmatpush1.msra.mxu0 0.0
    %97 = vmatprep.subr.mxu0 0.0
    %98 = vmatpush1.msra.mxu0 0.0
    %99 = vmatprep.subr.mxu0 0.0
    %100 = vmatpush1.msra.mxu0 0.0
    %101 = vmatprep.subr.mxu0 0.0
    %102 = vmatpush1.msra.mxu0 0.0
    %103 = vmatprep.subr.mxu0 0.0
    %104 = vmatpush1.msra.mxu0 0.0
    %105 = vmatprep.subr.mxu0 0.0
    %106 = vmatpush1.msra.mxu0 0.0
    %107 = vmatprep.subr.mxu0 0.0
    %108 = vmatpush1.msra.mxu0 0.0
    %109 = vmatprep.subr.mxu0 0.0
    %110 = vmatpush1.msra.mxu0 0.0
    %111 = vmatprep.subr.mxu0 0.0
    %112 = vmatpush1.msra.mxu0 0.0
    %113 = vmatprep.subr.mxu0 0.0
    %114 = vmatpush1.msra.mxu0 0.0
    %115 = vmatprep.subr.mxu0 0.0
    %116 = vmatpush1.msra.mxu0 0.0
    %117 = vmatprep.subr.mxu0 0.0
    %118 = vmatpush1.msra.mxu0 0.0
    %119 = vmatprep.mubr.f32.mxu0 0.0
    %120 = vmatmul.mubr.f32.gmra.mrb[0].mxu0 %v53
    %v121 = vpop.f32.mrb[0].mxu0
    %v122 = vadd.f32 %v49, %v121
    %v123 = vpop.f32.mrb[0].mxu0
    %124 = vdwg.mxu0
    %v125 = vmul.f32 %v122, 5.656854
    %126 = vst [vmem:[#allocation7] sm:$0xff] %v125
    // Predicated region
    $region22: #{tpu_custom_call.1} parent=1 // pred_check
      _
    $region23: #{tpu_custom_call.1} parent=1 // pred_check_branch
      %128 = sbr.rel (0) target = $region25
    $region24: #{tpu_custom_call.1} parent=1 // pred_region
      %s130 = ssub.s32 128, 128
      %131 = vsyncadd [#allocation4], %s130
      %s133 = sshll.u32 [#allocation7], 4
      %s134 = int_to_ptr.vmem [resolvable:$true] %s133
      %136 = dma.vmem_to_hbm [thread:$0]  %s134, 128, %s3, [#allocation4]
    $region25: #{tpu_custom_call.1} parent=1 // pred_fallthru
      _
    // Predicated region
    $region26: #{tpu_custom_call.1} parent=1 // pred_check
      _
    $region27: #{tpu_custom_call.1} parent=1 // pred_check_branch
      %138 = sbr.rel (0) target = $region29
    $region28: #{tpu_custom_call.1} parent=1 // pred_region
      %139 = dma.done [#allocation4], 128
    $region29: #{tpu_custom_call.1} parent=1 // pred_fallthru
      _
    %140 = vsyncpa [#allocation3], 1
    %141 = vsyncpa [#allocation6], 1
    %142 = vsyncpa [#allocation4], 1

</llo_original>
